<compile_context>
chip_gen: v7x
topology: tpu7x:2x2x1
jax: 0.10.0
libtpu: 0.0.40
codegen_flags: <defaults>
</compile_context>

<pallas_src>
import jax
import jax.numpy as jnp
from jax.experimental import pallas as pl
from jax.experimental.pallas import tpu as pltpu


# --------------------------------------------------------------------------
# Pallas kernels
# --------------------------------------------------------------------------
def mlp_l2norm_kernel(x_ref, w1_ref, b1_ref, w2_ref, b2_ref, o_ref):
    # x: (tm, Cin) f32;  w1: (Cin, nc) bf16;  b1: (1, nc) f32
    # w2: (nc, nc) bf16; b2: (1, nc) f32
    x = x_ref[...]
    h = jnp.dot(x.astype(jnp.bfloat16), w1_ref[...],
                preferred_element_type=jnp.float32) + b1_ref[...]
    h = jnp.maximum(h, 0.0)                                  # ReLU (f32, VPU)
    y = jnp.dot(h.astype(jnp.bfloat16), w2_ref[...],
                preferred_element_type=jnp.float32) + b2_ref[...]
    # Normalize(2): y / (||y||_2 + 1e-7); reciprocal goes to the EUP slot.
    norm = jnp.sqrt(jnp.sum(y * y, axis=1, keepdims=True))
    o_ref[...] = y * pl.reciprocal(norm + 1e-7, approx=True)


def lnc_kernel(x_ref, w_ref, b_ref, o_ref):
    # x: (1, Ca, ts)  channels on sublanes, spatial positions on lanes
    # w: (1, Ca, 1)   b: (1, 1, 1)
    # VPU multiply + sublane (XLU) reduce instead of an MXU matvec with N=1.
    logits = jnp.sum(x_ref[...] * w_ref[...], axis=1, keepdims=True) + b_ref[...]
    o_ref[...] = jax.nn.sigmoid(logits)        # (1, 1, ts) lane-dense store


# --------------------------------------------------------------------------
# Pallas wrappers
# --------------------------------------------------------------------------
def _round_up(x, m):
    return ((x + m - 1) // m) * m


def mlp_l2norm(x, w1, b1, w2, b2, *, max_tm=1024):
    """Linear(Cin->nc) + ReLU + Linear(nc->nc) + row-wise L2-normalize."""
    n, cin = x.shape
    nc = w1.shape[1]
    # Large row tiles amortize the ~0.35us/grid-step overhead, but keep >=2
    # grid steps when possible so both v7x TensorCores get work.
    tm = min(max_tm, max(8, pl.next_power_of_2(pl.cdiv(n, 2))))
    n_pad = _round_up(n, tm)
    if n_pad != n:
        x = jnp.pad(x, ((0, n_pad - n), (0, 0)))
    out = pl.pallas_call(
        mlp_l2norm_kernel,
        out_shape=jax.ShapeDtypeStruct((n_pad, nc), jnp.float32),
        grid=(n_pad // tm,),
        in_specs=[
            pl.BlockSpec((tm, cin), lambda i: (i, 0)),
            pl.BlockSpec((cin, nc), lambda i: (0, 0)),
            pl.BlockSpec((1, nc), lambda i: (0, 0)),
            pl.BlockSpec((nc, nc), lambda i: (0, 0)),
            pl.BlockSpec((1, nc), lambda i: (0, 0)),
        ],
        out_specs=pl.BlockSpec((tm, nc), lambda i: (i, 0)),
        compiler_params=pltpu.CompilerParams(
            dimension_semantics=("parallel",)),
    )(x,
      w1.astype(jnp.bfloat16), b1.reshape(1, -1).astype(jnp.float32),
      w2.astype(jnp.bfloat16), b2.reshape(1, -1).astype(jnp.float32))
    return out[:n]


def lnc_sigmoid_map(attn_nchw, wl, bl, *, max_ts=1024):
    """sigmoid(Linear(Ca->1)) for every spatial position.

    attn_nchw: (B, Ca, S) with S = ah*aw  ->  (B, S) float32.
    Spatial positions live on the 128-lane axis (lane-dense output)."""
    b, ca, s = attn_nchw.shape
    ts = min(max_ts, _round_up(s, 128))
    s_pad = _round_up(s, ts)
    if s_pad != s:
        attn_nchw = jnp.pad(attn_nchw, ((0, 0), (0, 0), (0, s_pad - s)))
    out = pl.pallas_call(
        lnc_kernel,
        out_shape=jax.ShapeDtypeStruct((b, 1, s_pad), jnp.float32),
        grid=(b, s_pad // ts),
        in_specs=[
            pl.BlockSpec((1, ca, ts), lambda i, j: (i, 0, j)),
            pl.BlockSpec((1, ca, 1), lambda i, j: (0, 0, 0)),
            pl.BlockSpec((1, 1, 1), lambda i, j: (0, 0, 0)),
        ],
        out_specs=pl.BlockSpec((1, 1, ts), lambda i, j: (i, 0, j)),
        compiler_params=pltpu.CompilerParams(
            dimension_semantics=("parallel", "parallel")),
    )(attn_nchw, wl.reshape(1, ca, 1), bl.reshape(1, 1, 1))
    return out.reshape(b, s_pad)[:, :s]


# --------------------------------------------------------------------------
# Forward pass (single feature level; lists handled by looping in Python)
# --------------------------------------------------------------------------
def attn_patch_sample_forward_level(raw_feat, attn_feat, params,
                                    patch_id, patch_id_attn,
                                    weights_strategy="half_learned"):
    """raw_feat: (B, C, fh, fw) NCHW; attn_feat: (B, Ca, ah, aw) NCHW."""
    b, c, fh, fw = raw_feat.shape
    _, ca, ah, aw = attn_feat.shape

    # ---- raw branch: sample patches, MLP + L2-norm (Pallas) --------------
    # TODO(synk): fuse this row gather into mlp_l2norm via a scalar-prefetch /
    # manual-DMA gather; a pl.Element row gather would force 1-row grid steps,
    # so the tiny XLA gather (fuses with the transpose under jit) stays here.
    feat_flat = jnp.transpose(raw_feat, (0, 2, 3, 1)).reshape(b, fh * fw, c)
    x_sample = feat_flat[:, patch_id, :].reshape(b * patch_id.shape[0], c)
    x_out = mlp_l2norm(x_sample, params["w1"], params["b1"],
                       params["w2"], params["b2"])

    # ---- attn branch: sample patches + L2-norm (tiny -> plain jnp) -------
    attn_nchw = attn_feat.reshape(b, ca, ah * aw)                  # (B, Ca, S)
    attn_sample = jnp.transpose(attn_nchw[:, :, patch_id_attn],
                                (0, 2, 1)).reshape(-1, ca)         # (B*P, Ca)
    attn_norm = jnp.sqrt(jnp.sum(attn_sample * attn_sample,
                                 axis=1, keepdims=True))
    attn_out = attn_sample / (attn_norm + 1e-7)

    weights_raw = None
    weights_attn = None
    if weights_strategy == "half_learned":
        # LNC classifier over every attn spatial position (Pallas, lane-dense)
        v1 = lnc_sigmoid_map(attn_nchw, params["wl"], params["bl"])  # (B, S)
        w_mean = jnp.mean(v1, axis=1, keepdims=True)                 # (B, 1)
        # NOTE: matches the reference asymmetry — attn weights come from the
        # raw sigmoid map, raw weights from the mean-normalized 0.5*w/mean map.
        weights_attn = v1[:, patch_id_attn].reshape(-1)
        # Equivalent of repeat_interleave(fh//ah, 1) / (fw//aw, 2) + gather,
        # without materializing the (B, fh, fw) expanded map.
        assert fh % ah == 0 and fw % aw == 0
        rh, rw = fh // ah, fw // aw
        attn_idx = ((patch_id // fw) // rh) * aw + (patch_id % fw) // rw
        weights_raw = (1.0 - 0.5 * v1[:, attn_idx] / w_mean).reshape(-1)

    return x_out, attn_out, weights_raw, weights_attn


def init_params(key, input_nc, attn_dim, nc, init_gain=0.02):
    # init_net(init_type='normal'): weights ~ N(0, init_gain), biases = 0.
    k1, k2, k3 = jax.random.split(key, 3)
    return {
        "w1": jax.random.normal(k1, (input_nc, nc), jnp.float32) * init_gain,
        "b1": jnp.zeros((nc,), jnp.float32),
        "w2": jax.random.normal(k2, (nc, nc), jnp.float32) * init_gain,
        "b2": jnp.zeros((nc,), jnp.float32),
        "wl": jax.random.normal(k3, (attn_dim, 1), jnp.float32) * init_gain,
        "bl": jnp.zeros((1,), jnp.float32),
    }


# --------------------------------------------------------------------------
if __name__ == "__main__":
    key = jax.random.PRNGKey(0)
    k_feat, k_attn, k_par, k_pid, k_pida = jax.random.split(key, 5)

    # Small shapes: batch=2, raw channels=4, raw spatial=16x16,
    # attn channels=8, attn spatial=8x8, hidden nc=32, num_patches=64.
    B, C, FH, FW = 2, 4, 16, 16
    CA, AH, AW = 8, 8, 8
    NC = 32
    NUM_PATCHES = 64

    raw_feat = jax.random.normal(k_feat, (B, C, FH, FW), jnp.float32)
    attn_feat = jax.random.normal(k_attn, (B, CA, AH, AW), jnp.float32)
    params = init_params(k_par, C, CA, NC)

    # Explicit patch ids (the module also supports passing patch_ids).
    patch_id = jax.random.permutation(k_pid, FH * FW)[:NUM_PATCHES]
    patch_id_attn = jax.random.permutation(k_pida, AH * AW)[:min(64, AH * AW)]

    fwd = jax.jit(attn_patch_sample_forward_level,
                  static_argnames=("weights_strategy",))
    x_out, attn_out, w_raw, w_attn = fwd(
        raw_feat, attn_feat, params, patch_id, patch_id_attn,
        weights_strategy="half_learned")
    jax.block_until_ready((x_out, attn_out, w_raw, w_attn))

    # Structure mirrors PyTorch return: (feats, weights, ids), each a
    # (raw_list, attn_list) tuple — here with one feature level.
    return_feats = ([x_out], [attn_out])
    return_weights = ([w_raw], [w_attn])
    return_ids = ([patch_id], [patch_id_attn])

    assert x_out.shape == (B * NUM_PATCHES, NC)
    assert attn_out.shape == (B * patch_id_attn.shape[0], CA)
    assert w_raw.shape == (B * NUM_PATCHES,)
    assert w_attn.shape == (B * patch_id_attn.shape[0],)
    assert bool(jnp.all(jnp.isfinite(x_out)))
    assert bool(jnp.all(jnp.isfinite(attn_out)))
    assert bool(jnp.all(jnp.isfinite(w_raw)))
    assert bool(jnp.all(jnp.isfinite(w_attn)))

    print("KERNEL_OK")
</pallas_src>

<mosaic_0001>
module attributes {stable_mosaic.version = 11 : i64} {
  func.func @mlp_l2norm_kernel(%arg0: i32, %arg1: memref<64x4xf32, #tpu.memory_space<vmem>>, %arg2: memref<4x32xbf16, #tpu.memory_space<vmem>>, %arg3: memref<1x32xf32, #tpu.memory_space<vmem>>, %arg4: memref<32x32xbf16, #tpu.memory_space<vmem>>, %arg5: memref<1x32xf32, #tpu.memory_space<vmem>>, %arg6: memref<64x32xf32, #tpu.memory_space<vmem>>) attributes {dimension_semantics = [#tpu.dimension_semantics<parallel>], iteration_bounds = array<i64: 2>, scalar_prefetch = 0 : i64, scratch_operands = 0 : i64, tpu.core_type = #tpu.core_type<tc>, window_params = [{transform_indices = @transform_0, window_bounds = array<i64: 64, 4>}, {pipeline_mode = #tpu.pipeline_mode<synchronous>, transform_indices = @transform_1, window_bounds = array<i64: 4, 32>}, {pipeline_mode = #tpu.pipeline_mode<synchronous>, transform_indices = @transform_2, window_bounds = array<i64: 1, 32>}, {pipeline_mode = #tpu.pipeline_mode<synchronous>, transform_indices = @transform_3, window_bounds = array<i64: 32, 32>}, {pipeline_mode = #tpu.pipeline_mode<synchronous>, transform_indices = @transform_4, window_bounds = array<i64: 1, 32>}, {transform_indices = @transform_5, window_bounds = array<i64: 64, 32>}]} {
    %c0 = arith.constant 0 : index
    %c0_0 = arith.constant 0 : index
    %0 = vector.load %arg1[%c0, %c0_0] : memref<64x4xf32, #tpu.memory_space<vmem>>, vector<64x4xf32>
    %1 = arith.truncf %0 : vector<64x4xf32> to vector<64x4xbf16>
    %c0_1 = arith.constant 0 : index
    %c0_2 = arith.constant 0 : index
    %2 = vector.load %arg2[%c0_1, %c0_2] : memref<4x32xbf16, #tpu.memory_space<vmem>>, vector<4x32xbf16>
    %cst = arith.constant dense<0.000000e+00> : vector<64x32xf32>
    %3 = tpu.matmul %1, %2, %cst {dimension_numbers = #tpu.dot_dimension_numbers<[1], [0], [0], [1], [0, 0, 1, 1], [], []>} : vector<64x4xbf16>, vector<4x32xbf16>, vector<64x32xf32> -> vector<64x32xf32>
    %c0_3 = arith.constant 0 : index
    %c0_4 = arith.constant 0 : index
    %4 = vector.load %arg3[%c0_3, %c0_4] : memref<1x32xf32, #tpu.memory_space<vmem>>, vector<1x32xf32>
    %5 = vector.broadcast %4 : vector<1x32xf32> to vector<64x32xf32>
    %6 = arith.addf %3, %5 : vector<64x32xf32>
    %cst_5 = arith.constant 0.000000e+00 : f32
    %7 = vector.broadcast %cst_5 : f32 to vector<64x32xf32>
    %8 = arith.maximumf %6, %7 : vector<64x32xf32>
    %9 = arith.truncf %8 : vector<64x32xf32> to vector<64x32xbf16>
    %c0_6 = arith.constant 0 : index
    %c0_7 = arith.constant 0 : index
    %10 = vector.load %arg4[%c0_6, %c0_7] : memref<32x32xbf16, #tpu.memory_space<vmem>>, vector<32x32xbf16>
    %cst_8 = arith.constant dense<0.000000e+00> : vector<64x32xf32>
    %11 = tpu.matmul %9, %10, %cst_8 {dimension_numbers = #tpu.dot_dimension_numbers<[1], [0], [0], [1], [0, 0, 1, 1], [], []>} : vector<64x32xbf16>, vector<32x32xbf16>, vector<64x32xf32> -> vector<64x32xf32>
    %c0_9 = arith.constant 0 : index
    %c0_10 = arith.constant 0 : index
    %12 = vector.load %arg5[%c0_9, %c0_10] : memref<1x32xf32, #tpu.memory_space<vmem>>, vector<1x32xf32>
    %13 = vector.broadcast %12 : vector<1x32xf32> to vector<64x32xf32>
    %14 = arith.addf %11, %13 : vector<64x32xf32>
    %15 = arith.mulf %14, %14 : vector<64x32xf32>
    %cst_11 = arith.constant dense<0.000000e+00> : vector<64xf32>
    %16 = vector.multi_reduction <add>, %15, %cst_11 [1] : vector<64x32xf32> to vector<64xf32>
    %17 = vector.shape_cast %16 : vector<64xf32> to vector<64x1xf32>
    %18 = math.sqrt %17 : vector<64x1xf32>
    %cst_12 = arith.constant 1.000000e-07 : f32
    %19 = vector.broadcast %cst_12 : f32 to vector<64x1xf32>
    %20 = arith.addf %18, %19 : vector<64x1xf32>
    %21 = tpu.reciprocal %20 {approx = true} : vector<64x1xf32> -> vector<64x1xf32>
    %22 = vector.broadcast %21 : vector<64x1xf32> to vector<64x32xf32>
    %23 = arith.mulf %14, %22 : vector<64x32xf32>
    %c0_13 = arith.constant 0 : index
    %c0_14 = arith.constant 0 : index
    %24 = vector.load %arg6[%c0_13, %c0_14] : memref<64x32xf32, #tpu.memory_space<vmem>>, vector<64x32xf32>
    tpu.vector_store %arg6[%c0_13, %c0_14], %23 {strides = array<i32>} : memref<64x32xf32, #tpu.memory_space<vmem>>, vector<64x32xf32>,
    return
  }
  func.func @transform_0(%arg0: i32) -> (i32, i32) {
    %c0_i32 = arith.constant 0 : i32
    %c0_i32_0 = arith.constant 0 : i32
    return %arg0, %c0_i32 : i32, i32
  }
  func.func @transform_1(%arg0: i32) -> (i32, i32) {
    %c0_i32 = arith.constant 0 : i32
    %c0_i32_0 = arith.constant 0 : i32
    %c0_i32_1 = arith.constant 0 : i32
    return %c0_i32, %c0_i32_0 : i32, i32
  }
  func.func @transform_2(%arg0: i32) -> (i32, i32) {
    %c0_i32 = arith.constant 0 : i32
    %c0_i32_0 = arith.constant 0 : i32
    %c0_i32_1 = arith.constant 0 : i32
    return %c0_i32, %c0_i32_0 : i32, i32
  }
  func.func @transform_3(%arg0: i32) -> (i32, i32) {
    %c0_i32 = arith.constant 0 : i32
    %c0_i32_0 = arith.constant 0 : i32
    %c0_i32_1 = arith.constant 0 : i32
    return %c0_i32, %c0_i32_0 : i32, i32
  }
  func.func @transform_4(%arg0: i32) -> (i32, i32) {
    %c0_i32 = arith.constant 0 : i32
    %c0_i32_0 = arith.constant 0 : i32
    %c0_i32_1 = arith.constant 0 : i32
    return %c0_i32, %c0_i32_0 : i32, i32
  }
  func.func @transform_5(%arg0: i32) -> (i32, i32) {
    %c0_i32 = arith.constant 0 : i32
    %c0_i32_0 = arith.constant 0 : i32
    return %arg0, %c0_i32 : i32, i32
  }
}

module attributes {stable_mosaic.version = 11 : i64} {
  func.func @lnc_kernel(%arg0: i32, %arg1: i32, %arg2: memref<1x8x128xf32, #tpu.memory_space<vmem>>, %arg3: memref<1x8x1xf32, #tpu.memory_space<vmem>>, %arg4: memref<1x1x1xf32, #tpu.memory_space<vmem>>, %arg5: memref<1x1x128xf32, #tpu.memory_space<vmem>>) attributes {dimension_semantics = [#tpu.dimension_semantics<parallel>, #tpu.dimension_semantics<parallel>], iteration_bounds = array<i64: 2, 1>, scalar_prefetch = 0 : i64, scratch_operands = 0 : i64, tpu.core_type = #tpu.core_type<tc>, window_params = [{transform_indices = @transform_0, window_bounds = array<i64: 1, 8, 128>}, {pipeline_mode = #tpu.pipeline_mode<synchronous>, transform_indices = @transform_1, window_bounds = array<i64: 1, 8, 1>}, {pipeline_mode = #tpu.pipeline_mode<synchronous>, transform_indices = @transform_2, window_bounds = array<i64: 1, 1, 1>}, {transform_indices = @transform_3, window_bounds = array<i64: 1, 1, 128>}]} {
    %c0 = arith.constant 0 : index
    %c0_0 = arith.constant 0 : index
    %c0_1 = arith.constant 0 : index
    %0 = vector.load %arg2[%c0, %c0_0, %c0_1] : memref<1x8x128xf32, #tpu.memory_space<vmem>>, vector<1x8x128xf32>
    %c0_2 = arith.constant 0 : index
    %c0_3 = arith.constant 0 : index
    %c0_4 = arith.constant 0 : index
    %1 = vector.load %arg3[%c0_2, %c0_3, %c0_4] : memref<1x8x1xf32, #tpu.memory_space<vmem>>, vector<1x8x1xf32>
    %2 = vector.broadcast %1 : vector<1x8x1xf32> to vector<1x8x128xf32>
    %3 = arith.mulf %0, %2 : vector<1x8x128xf32>
    %cst = arith.constant dense<0.000000e+00> : vector<1x128xf32>
    %4 = vector.multi_reduction <add>, %3, %cst [1] : vector<1x8x128xf32> to vector<1x128xf32>
    %5 = vector.shape_cast %4 : vector<1x128xf32> to vector<1x1x128xf32>
    %c0_5 = arith.constant 0 : index
    %c0_6 = arith.constant 0 : index
    %c0_7 = arith.constant 0 : index
    %6 = vector.load %arg4[%c0_5, %c0_6, %c0_7] : memref<1x1x1xf32, #tpu.memory_space<vmem>>, vector<1x1x1xf32>
    %7 = vector.broadcast %6 : vector<1x1x1xf32> to vector<1x1x128xf32>
    %8 = arith.addf %5, %7 : vector<1x1x128xf32>
    %9 = arith.negf %8 : vector<1x1x128xf32>
    %10 = math.exp %9 : vector<1x1x128xf32>
    %cst_8 = arith.constant 1.000000e+00 : f32
    %11 = vector.broadcast %cst_8 : f32 to vector<1x1x128xf32>
    %12 = arith.addf %11, %10 : vector<1x1x128xf32>
    %13 = arith.divf %11, %12 : vector<1x1x128xf32>
    %c0_9 = arith.constant 0 : index
    %c0_10 = arith.constant 0 : index
    %c0_11 = arith.constant 0 : index
    %14 = vector.load %arg5[%c0_9, %c0_10, %c0_11] : memref<1x1x128xf32, #tpu.memory_space<vmem>>, vector<1x1x128xf32>
    tpu.vector_store %arg5[%c0_9, %c0_10, %c0_11], %13 {strides = array<i32>} : memref<1x1x128xf32, #tpu.memory_space<vmem>>, vector<1x1x128xf32>,
    return
  }
  func.func @transform_0(%arg0: i32, %arg1: i32) -> (i32, i32, i32) {
    %c0_i32 = arith.constant 0 : i32
    %c0_i32_0 = arith.constant 0 : i32
    return %arg0, %c0_i32, %arg1 : i32, i32, i32
  }
  func.func @transform_1(%arg0: i32, %arg1: i32) -> (i32, i32, i32) {
    %c0_i32 = arith.constant 0 : i32
    %c0_i32_0 = arith.constant 0 : i32
    %c0_i32_1 = arith.constant 0 : i32
    %c0_i32_2 = arith.constant 0 : i32
    return %c0_i32, %c0_i32_0, %c0_i32_1 : i32, i32, i32
  }
  func.func @transform_2(%arg0: i32, %arg1: i32) -> (i32, i32, i32) {
    %c0_i32 = arith.constant 0 : i32
    %c0_i32_0 = arith.constant 0 : i32
    %c0_i32_1 = arith.constant 0 : i32
    %c0_i32_2 = arith.constant 0 : i32
    return %c0_i32, %c0_i32_0, %c0_i32_1 : i32, i32, i32
  }
  func.func @transform_3(%arg0: i32, %arg1: i32) -> (i32, i32, i32) {
    %c0_i32 = arith.constant 0 : i32
    %c0_i32_0 = arith.constant 0 : i32
    return %arg0, %c0_i32, %arg1 : i32, i32, i32
  }
}

</mosaic_0001>

<llo_original>
// kernel: attn_patch_sample_forward_level.2
$region0: #{attn_patch_sample_forward_level.2}
  #allocation0 [shape = 'u32[]', space=smem, size = 0x4, offset = 0x4, fixed_abs, tag = 'smem constant byte address 0x4 - core index']
  #allocation1 [shape = 'u32[144,128]{1,0:T(1,128)}', space=vmem, size = 0x12000, scoped, tag = 'internal scratch']
  %s0 = inlined_call_operand.vmem [shape: f32[128,4], index: 0, kind: input, shape index: {}]
  %s1 = inlined_call_operand.vmem [shape: bf16[4,32], index: 1, kind: input, shape index: {}]
  %s2 = inlined_call_operand.vmem [shape: f32[1,32], index: 2, kind: input, shape index: {}]
  %s3 = inlined_call_operand.vmem [shape: bf16[32,32], index: 3, kind: input, shape index: {}]
  %s4 = inlined_call_operand.vmem [shape: f32[1,32], index: 4, kind: input, shape index: {}]
  %s5 = inlined_call_operand.vmem [shape: f32[128,32], index: 5, kind: output, shape index: {}]
  %s6 = sld [smem:[#allocation0]]
  $region53: #{attn_patch_sample_forward_level.2} parent=0
    _
  %s8 = ssub.s32 1, %s6
  %s9 = scalar_select 0, %s8, %s6
  loop: start=0, step=1, limit=4
  $region2: #{attn_patch_sample_forward_level.2} parent=0 // loop_pre_header
    _
  $region3: #{attn_patch_sample_forward_level.2} parent=0 // loop_header
    %s11 = sphi 0, %s15
    %p12 = scmp.ge.s32.totalorder %s11, 4
    %s21 = sphi 0, %s23
    %s24 = sphi 0, %s21
    %s25 = sphi 0, %s24
    %s41 = sphi 0, %s25
    %s45 = sphi 0, %s45
    %s47 = sphi 0, %s45
    %s48 = sphi 0, %s47
    %s62 = sphi 0, %s48
    %s66 = sphi 0, %s66
    %s68 = sphi 0, %s66
    %s69 = sphi 0, %s68
    %s83 = sphi 0, %s69
    %s87 = sphi 0, %s87
    %s89 = sphi 0, %s87
    %s90 = sphi 0, %s89
    %s104 = sphi 0, %s90
    %s108 = sphi 0, %s108
    %s110 = sphi 0, %s108
    %s111 = sphi 0, %s110
    %s125 = sphi 0, %s111
    %s131 = sphi 0, %s133
    %s134 = sphi 0, %s131
    %s135 = sphi 0, %s134
    %s151 = sphi 0, %s135
  $region4: #{attn_patch_sample_forward_level.2} parent=0 // loop_header_branch
    %14 = sbr.rel (%p12) target = $region8
  $region5: #{attn_patch_sample_forward_level.2} parent=0 // loop_body
    %s16 = ssub.s32 %s11, 1
    %s17 = ssub.s32 %s11, 2
    %s18 = sadd.s32 %s11, 1
    %s19 = ssub.s32 %s11, %s18
    %p20 = scmp.eq.s32.totalorder %s19, 0
    %s22 = sadd.s32 %s21, 1
    %s23 = scalar_select %p20, %s21, %s22
    %p26 = pneg %p20
    %p27 = scmp.eq.s32.totalorder %s11, 1
    %p28 = por %p26, %p27
    %p29 = scmp.ne.s32.totalorder %s21, %s24
    %p30 = scmp.eq.s32.totalorder %s11, 0
    %p31 = por %p29, %p30
    %p32 = scmp.ne.s32.totalorder %s21, %s24
    %p33 = scmp.eq.s32.totalorder %s16, 1
    %p34 = por %p32, %p33
    %p35 = scmp.ne.s32.totalorder %s24, %s25
    %p36 = scmp.eq.s32.totalorder %s16, 0
    %p37 = por %p35, %p36
    %p38 = scmp.ne.s32.totalorder %s24, %s25
    %p39 = scmp.eq.s32.totalorder %s17, 1
    %p40 = por %p38, %p39
    %p42 = scmp.ne.s32.totalorder %s25, %s41
    %p43 = scmp.eq.s32.totalorder %s17, 0
    %p44 = por %p42, %p43
    %s46 = sadd.s32 %s45, 1
    %p49 = scmp.eq.s32.totalorder %s11, 1
    %p50 = scmp.ne.s32.totalorder %s45, %s47
    %p51 = scmp.eq.s32.totalorder %s11, 0
    %p52 = por %p50, %p51
    %p53 = scmp.ne.s32.totalorder %s45, %s47
    %p54 = scmp.eq.s32.totalorder %s16, 1
    %p55 = por %p53, %p54
    %p56 = scmp.ne.s32.totalorder %s47, %s48
    %p57 = scmp.eq.s32.totalorder %s16, 0
    %p58 = por %p56, %p57
    %p59 = scmp.ne.s32.totalorder %s47, %s48
    %p60 = scmp.eq.s32.totalorder %s17, 1
    %p61 = por %p59, %p60
    %p63 = scmp.ne.s32.totalorder %s48, %s62
    %p64 = scmp.eq.s32.totalorder %s17, 0
    %p65 = por %p63, %p64
    %s67 = sadd.s32 %s66, 1
    %p70 = scmp.eq.s32.totalorder %s11, 1
    %p71 = scmp.ne.s32.totalorder %s66, %s68
    %p72 = scmp.eq.s32.totalorder %s11, 0
    %p73 = por %p71, %p72
    %p74 = scmp.ne.s32.totalorder %s66, %s68
    %p75 = scmp.eq.s32.totalorder %s16, 1
    %p76 = por %p74, %p75
    %p77 = scmp.ne.s32.totalorder %s68, %s69
    %p78 = scmp.eq.s32.totalorder %s16, 0
    %p79 = por %p77, %p78
    %p80 = scmp.ne.s32.totalorder %s68, %s69
    %p81 = scmp.eq.s32.totalorder %s17, 1
    %p82 = por %p80, %p81
    %p84 = scmp.ne.s32.totalorder %s69, %s83
    %p85 = scmp.eq.s32.totalorder %s17, 0
    %p86 = por %p84, %p85
    %s88 = sadd.s32 %s87, 1
    %p91 = scmp.eq.s32.totalorder %s11, 1
    %p92 = scmp.ne.s32.totalorder %s87, %s89
    %p93 = scmp.eq.s32.totalorder %s11, 0
    %p94 = por %p92, %p93
    %p95 = scmp.ne.s32.totalorder %s87, %s89
    %p96 = scmp.eq.s32.totalorder %s16, 1
    %p97 = por %p95, %p96
    %p98 = scmp.ne.s32.totalorder %s89, %s90
    %p99 = scmp.eq.s32.totalorder %s16, 0
    %p100 = por %p98, %p99
    %p101 = scmp.ne.s32.totalorder %s89, %s90
    %p102 = scmp.eq.s32.totalorder %s17, 1
    %p103 = por %p101, %p102
    %p105 = scmp.ne.s32.totalorder %s90, %s104
    %p106 = scmp.eq.s32.totalorder %s17, 0
    %p107 = por %p105, %p106
    %s109 = sadd.s32 %s108, 1
    %p112 = scmp.eq.s32.totalorder %s11, 1
    %p113 = scmp.ne.s32.totalorder %s108, %s110
    %p114 = scmp.eq.s32.totalorder %s11, 0
    %p115 = por %p113, %p114
    %p116 = scmp.ne.s32.totalorder %s108, %s110
    %p117 = scmp.eq.s32.totalorder %s16, 1
    %p118 = por %p116, %p117
    %p119 = scmp.ne.s32.totalorder %s110, %s111
    %p120 = scmp.eq.s32.totalorder %s16, 0
    %p121 = por %p119, %p120
    %p122 = scmp.ne.s32.totalorder %s110, %s111
    %p123 = scmp.eq.s32.totalorder %s17, 1
    %p124 = por %p122, %p123
    %p126 = scmp.ne.s32.totalorder %s111, %s125
    %p127 = scmp.eq.s32.totalorder %s17, 0
    %p128 = por %p126, %p127
    %s129 = ssub.s32 %s11, %s18
    %p130 = scmp.eq.s32.totalorder %s129, 0
    %s132 = sadd.s32 %s131, 1
    %s133 = scalar_select %p130, %s131, %s132
    %p136 = pneg %p130
    %p137 = scmp.eq.s32.totalorder %s11, 1
    %p138 = por %p136, %p137
    %p139 = scmp.ne.s32.totalorder %s131, %s134
    %p140 = scmp.eq.s32.totalorder %s11, 0
    %p141 = por %p139, %p140
    %p142 = scmp.ne.s32.totalorder %s131, %s134
    %p143 = scmp.eq.s32.totalorder %s16, 1
    %p144 = por %p142, %p143
    %p145 = scmp.ne.s32.totalorder %s134, %s135
    %p146 = scmp.eq.s32.totalorder %s16, 0
    %p147 = por %p145, %p146
    %p148 = scmp.ne.s32.totalorder %s134, %s135
    %p149 = scmp.eq.s32.totalorder %s17, 1
    %p150 = por %p148, %p149
    %p152 = scmp.ne.s32.totalorder %s135, %s151
    %p153 = scmp.eq.s32.totalorder %s17, 0
    %p154 = por %p152, %p153
    %p155 = scmp.le.s32.totalorder 1, %s11
    %p156 = scmp.lt.s32.totalorder %s11, 3
    %p157 = pnand %p155, %p156
    %p158 = pneg %p157
    // Predicated region
    $region9: #{attn_patch_sample_forward_level.2} parent=5 // pred_check
      _
    $region10: #{attn_patch_sample_forward_level.2} parent=5 // pred_check_branch
      %160 = sbr.rel (%p157) target = $region12
    $region11: #{attn_patch_sample_forward_level.2} parent=5 // pred_region
      %s161 = ssub.s32 %s11, 1
      // Predicated region
      $region13: #{attn_patch_sample_forward_level.2} parent=11 // pred_check
        %p162 = pneg %p58
      $region14: #{attn_patch_sample_forward_level.2} parent=11 // pred_check_branch
        %164 = sbr.rel (%p162) target = $region16
      $region15: #{attn_patch_sample_forward_level.2} parent=11 // pred_region
        _
      $region16: #{attn_patch_sample_forward_level.2} parent=11 // pred_fallthru
        _
      // Predicated region
      $region17: #{attn_patch_sample_forward_level.2} parent=11 // pred_check
        %p165 = pneg %p79
      $region18: #{attn_patch_sample_forward_level.2} parent=11 // pred_check_branch
        %167 = sbr.rel (%p165) target = $region20
      $region19: #{attn_patch_sample_forward_level.2} parent=11 // pred_region
        _
      $region20: #{attn_patch_sample_forward_level.2} parent=11 // pred_fallthru
        _
      // Predicated region
      $region21: #{attn_patch_sample_forward_level.2} parent=11 // pred_check
        %p168 = pneg %p100
      $region22: #{attn_patch_sample_forward_level.2} parent=11 // pred_check_branch
        %170 = sbr.rel (%p168) target = $region24
      $region23: #{attn_patch_sample_forward_level.2} parent=11 // pred_region
        _
      $region24: #{attn_patch_sample_forward_level.2} parent=11 // pred_fallthru
        _
      // Predicated region
      $region25: #{attn_patch_sample_forward_level.2} parent=11 // pred_check
        %p171 = pneg %p121
      $region26: #{attn_patch_sample_forward_level.2} parent=11 // pred_check_branch
        %173 = sbr.rel (%p171) target = $region28
      $region27: #{attn_patch_sample_forward_level.2} parent=11 // pred_region
        _
      $region28: #{attn_patch_sample_forward_level.2} parent=11 // pred_fallthru
        _
    $region12: #{attn_patch_sample_forward_level.2} parent=5 // pred_fallthru
      _
    %p174 = scmp.lt.s32.totalorder %s11, 2
    // Predicated region
    $region29: #{attn_patch_sample_forward_level.2} parent=5 // pred_check
      %p175 = pneg %p174
    $region30: #{attn_patch_sample_forward_level.2} parent=5 // pred_check_branch
      %177 = sbr.rel (%p175) target = $region32
    $region31: #{attn_patch_sample_forward_level.2} parent=5 // pred_region
      // Predicated region
      $region33: #{attn_patch_sample_forward_level.2} parent=31 // pred_check
        %p178 = pneg %p31
      $region34: #{attn_patch_sample_forward_level.2} parent=31 // pred_check_branch
        %180 = sbr.rel (%p178) target = $region36
      $region35: #{attn_patch_sample_forward_level.2} parent=31 // pred_region
        %s181 = smul.u32 8, %s11
        %p182 = scmp.lt.s32.totalorder %s181, 15
        %s183 = scalar_select %p182, %s181, 15
        %s184 = smul.addr %s183, 8
        %s185 = scalar_lea.vmem %s0, %s184
        %s186 = smul.u32 8, %s11
      $region36: #{attn_patch_sample_forward_level.2} parent=31 // pred_fallthru
        _
    $region32: #{attn_patch_sample_forward_level.2} parent=5 // pred_fallthru
      _
    %p187 = scmp.le.s32.totalorder 1, %s11
    %p188 = scmp.lt.s32.totalorder %s11, 3
    %p189 = pnand %p187, %p188
    %p190 = pneg %p189
    // Predicated region
    $region37: #{attn_patch_sample_forward_level.2} parent=5 // pred_check
      _
    $region38: #{attn_patch_sample_forward_level.2} parent=5 // pred_check_branch
      %192 = sbr.rel (%p189) target = $region40
    $region39: #{attn_patch_sample_forward_level.2} parent=5 // pred_region
      %s193 = ssub.s32 %s11, 1
      %s194 = smul.u32 8, %s16
      %p195 = scmp.lt.s32.totalorder %s194, 15
      %s196 = scalar_select %p195, %s194, 15
      %s197 = smul.addr %s196, 8
      %s198 = scalar_lea.vmem %s0, %s197
      %p199 = pneg %p37
      %p200 = pneg %p34
      %p201 = pneg %p58
      %p202 = pneg %p55
      %p203 = pneg %p79
      %p204 = pneg %p76
      %p205 = pneg %p100
      %p206 = pneg %p97
      %p207 = pneg %p121
      %p208 = pneg %p118
      %p209 = pneg %p147
      %p210 = pneg %p144
      %s211 = smul.u32 8, %s16
      %p212 = scmp.lt.s32.totalorder %s211, 15
      %s213 = scalar_select %p212, %s211, 15
      %s214 = smul.addr %s213, 8
      %s215 = scalar_lea.vmem %s5, %s214
      %s216 = smul.u32 8, %s16
      %p217 = scmp.lt.s32.totalorder %s216, 15
      %s218 = scalar_select %p217, %s216, 15
      %s219 = smul.addr %s218, 8
      %s220 = scalar_lea.vmem %s0, %s219
      %s221 = smul.u32 8, %s16
      %s222 = smul.u32 8, %s16
      %p223 = scmp.lt.s32.totalorder %s222, 15
      %s224 = scalar_select %p223, %s222, 15
      %s225 = smul.addr %s224, 8
      %s226 = scalar_lea.vmem %s5, %s225
      %s227 = smul.u32 8, %s16
      %v229 = vld [vmem:[%s220] sm:$0xff]
      %v230 = vld [vmem:[%s220 + $0x8] sm:$0xff]
      %v231 = vld [vmem:[%s220 + $0x10] sm:$0xff]
      %v232 = vld [vmem:[%s220 + $0x18] sm:$0xff]
      %v233 = vld [vmem:[%s220 + $0x20] sm:$0xff]
      %v234 = vld [vmem:[%s220 + $0x28] sm:$0xff]
      %v235 = vld [vmem:[%s220 + $0x30] sm:$0xff]
      %v236 = vld [vmem:[%s220 + $0x38] sm:$0xff]
      %v237 = vpack.c.bf16 %v230, %v229
      %v238 = vpack.c.bf16 %v232, %v231
      %v239 = vpack.c.bf16 %v234, %v233
      %v240 = vpack.c.bf16 %v236, %v235
      %v241 = vld [vmem:[%s1] sm:$0x3]
      %v242 = vld [vmem:[%s2] sm:$0x1]
      %v244 = vlaneseq
      %v245 = vshrl.u32 %v244, 7
      %v246 = vsub.s32 0, %v245
      %v247 = vrot.slane %v242, %v246
      %vm249 = vcmask 31744
      %v251 = vsel %vm249, %v237, 0
      %v254 = vsel %vm249, %v238, 0
      %v257 = vsel %vm249, %v239, 0
      %v260 = vsel %vm249, %v240, 0
      %vm262 = vcmask 1041408
      %v264 = vsel %vm262, %v241, 0
      %266 = vmatprep.subr.bf16.mxu0 0
      %267 = vmatpush1.bf16.msra.mxu0 %v264
      %268 = vmatprep.subr.bf16.mxu0 0
      %269 = vmatpush1.bf16.msra.mxu0 0
      %270 = vmatprep.subr.bf16.mxu0 0
      %271 = vmatpush1.bf16.msra.mxu0 0
      %272 = vmatprep.subr.bf16.mxu0 0
      %273 = vmatpush1.bf16.msra.mxu0 0
      %274 = vmatprep.subr.bf16.mxu0 0
      %275 = vmatpush1.bf16.msra.mxu0 0
      %276 = vmatprep.subr.bf16.mxu0 0
      %277 = vmatpush1.bf16.msra.mxu0 0
      %278 = vmatprep.subr.bf16.mxu0 0
      %279 = vmatpush1.bf16.msra.mxu0 0
      %280 = vmatprep.subr.bf16.mxu0 0
      %281 = vmatpush1.bf16.msra.mxu0 0
      %282 = vmatprep.subr.bf16.mxu0 0
      %283 = vmatpush1.bf16.msra.mxu0 0
      %284 = vmatprep.subr.bf16.mxu0 0
      %285 = vmatpush1.bf16.msra.mxu0 0
      %286 = vmatprep.subr.bf16.mxu0 0
      %287 = vmatpush1.bf16.msra.mxu0 0
      %288 = vmatprep.subr.bf16.mxu0 0
      %289 = vmatpush1.bf16.msra.mxu0 0
      %290 = vmatprep.subr.bf16.mxu0 0
      %291 = vmatpush1.bf16.msra.mxu0 0
      %292 = vmatprep.subr.bf16.mxu0 0
      %293 = vmatpush1.bf16.msra.mxu0 0
      %294 = vmatprep.subr.bf16.mxu0 0
      %295 = vmatpush1.bf16.msra.mxu0 0
      %296 = vmatprep.subr.bf16.mxu0 0
      %297 = vmatpush1.bf16.msra.mxu0 0
      %298 = vmatprep.mubr.bf16.mxu0 0
      %299 = vmatmul.mubr.bf16.gmra.mrb[0].mxu0 %v251
      %v300 = vpop.f32.mrb[0].mxu0
      %v301 = vadd.f32 %v247, %v300
      %v302 = vpop.f32.mrb[0].mxu0
      %v303 = vpop.f32.mrb[0].mxu0
      %v304 = vadd.f32 %v247, %v303
      %v305 = vpop.f32.mrb[0].mxu0
      %306 = vmatprep.mubr.bf16.mxu0 0
      %307 = vmatmul.mubr.bf16.gmra.mrb[0].mxu0 %v254
      %v308 = vpop.f32.mrb[0].mxu0
      %v309 = vadd.f32 %v247, %v308
      %v310 = vpop.f32.mrb[0].mxu0
      %v311 = vpop.f32.mrb[0].mxu0
      %v312 = vadd.f32 %v247, %v311
      %v313 = vpop.f32.mrb[0].mxu0
      %314 = vmatprep.mubr.bf16.mxu0 0
      %315 = vmatmul.mubr.bf16.gmra.mrb[0].mxu0 %v257
      %v316 = vpop.f32.mrb[0].mxu0
      %v317 = vadd.f32 %v247, %v316
      %v318 = vpop.f32.mrb[0].mxu0
      %v319 = vpop.f32.mrb[0].mxu0
      %v320 = vadd.f32 %v247, %v319
      %v321 = vpop.f32.mrb[0].mxu0
      %322 = vmatprep.mubr.bf16.mxu0 0
      %323 = vmatmul.mubr.bf16.gmra.mrb[0].mxu0 %v260
      %v324 = vpop.f32.mrb[0].mxu0
      %v325 = vadd.f32 %v247, %v324
      %v326 = vpop.f32.mrb[0].mxu0
      %v327 = vpop.f32.mrb[0].mxu0
      %v328 = vadd.f32 %v247, %v327
      %v329 = vpop.f32.mrb[0].mxu0
      %330 = vdwg.mxu0
      %v331 = vmax.f32 %v301, 0.0
      %v332 = vmax.f32 %v304, 0.0
      %v333 = vmax.f32 %v309, 0.0
      %v334 = vmax.f32 %v312, 0.0
      %v335 = vmax.f32 %v317, 0.0
      %v336 = vmax.f32 %v320, 0.0
      %v337 = vmax.f32 %v325, 0.0
      %v338 = vmax.f32 %v328, 0.0
      %v339 = vpack.c.bf16 %v332, %v331
      %v340 = vpack.c.bf16 %v334, %v333
      %v341 = vpack.c.bf16 %v336, %v335
      %v342 = vpack.c.bf16 %v338, %v337
      %v343 = vld [vmem:[%s3] sm:$0xf]
      %v344 = vld [vmem:[%s3 + $0x4] sm:$0xf]
      %v345 = vld [vmem:[%s3 + $0x8] sm:$0xf]
      %v346 = vld [vmem:[%s3 + $0xc] sm:$0xf]
      %v347 = vld [vmem:[%s4] sm:$0x1]
      %v349 = vlaneseq
      %v350 = vshrl.u32 %v349, 7
      %v351 = vsub.s32 0, %v350
      %v352 = vrot.slane %v347, %v351
      %v358 = vunpack.c.l.b16 %v343
      %v359 = vunpack.c.l.b16 %v344
      %v360 = vunpack.c.l.b16 %v345
      %v361 = vunpack.c.l.b16 %v346
      %v362 = vpack.c.b16 %v359, %v358
      %v363 = vpack.c.b16 %v361, %v360
      %vm366 = vcmask 261120
      %v368 = vsel %vm366, %v339, 0
      %v371 = vsel %vm366, %v340, 0
      %v374 = vsel %vm366, %v341, 0
      %v377 = vsel %vm366, %v342, 0
      %379 = vmatprep.subr.bf16.mxu0 0
      %380 = vmatpush1.bf16.msra.mxu0 %v362
      %381 = vmatprep.subr.bf16.mxu0 0
      %382 = vmatpush1.bf16.msra.mxu0 %v363
      %383 = vmatprep.subr.bf16.mxu0 0
      %384 = vmatpush1.bf16.msra.mxu0 0
      %385 = vmatprep.subr.bf16.mxu0 0
      %386 = vmatpush1.bf16.msra.mxu0 0
      %387 = vmatprep.subr.bf16.mxu0 0
      %388 = vmatpush1.bf16.msra.mxu0 0
      %389 = vmatprep.subr.bf16.mxu0 0
      %390 = vmatpush1.bf16.msra.mxu0 0
      %391 = vmatprep.subr.bf16.mxu0 0
      %392 = vmatpush1.bf16.msra.mxu0 0
      %393 = vmatprep.subr.bf16.mxu0 0
      %394 = vmatpush1.bf16.msra.mxu0 0
      %395 = vmatprep.subr.bf16.mxu0 0
      %396 = vmatpush1.bf16.msra.mxu0 0
      %397 = vmatprep.subr.bf16.mxu0 0
      %398 = vmatpush1.bf16.msra.mxu0 0
      %399 = vmatprep.subr.bf16.mxu0 0
      %400 = vmatpush1.bf16.msra.mxu0 0
      %401 = vmatprep.subr.bf16.mxu0 0
      %402 = vmatpush1.bf16.msra.mxu0 0
      %403 = vmatprep.subr.bf16.mxu0 0
      %404 = vmatpush1.bf16.msra.mxu0 0
      %405 = vmatprep.subr.bf16.mxu0 0
      %406 = vmatpush1.bf16.msra.mxu0 0
      %407 = vmatprep.subr.bf16.mxu0 0
      %408 = vmatpush1.bf16.msra.mxu0 0
      %409 = vmatprep.subr.bf16.mxu0 0
      %410 = vmatpush1.bf16.msra.mxu0 0
      %411 = vmatprep.mubr.bf16.mxu0 0
      %412 = vmatmul.mubr.bf16.gmra.mrb[0].mxu0 %v368
      %v413 = vpop.f32.mrb[0].mxu0
      %v414 = vadd.f32 %v352, %v413
      %v415 = vpop.f32.mrb[0].mxu0
      %v416 = vpop.f32.mrb[0].mxu0
      %v417 = vadd.f32 %v352, %v416
      %v418 = vpop.f32.mrb[0].mxu0
      %419 = vmatprep.mubr.bf16.mxu0 0
      %420 = vmatmul.mubr.bf16.gmra.mrb[0].mxu0 %v371
      %v421 = vpop.f32.mrb[0].mxu0
      %v422 = vadd.f32 %v352, %v421
      %v423 = vpop.f32.mrb[0].mxu0
      %v424 = vpop.f32.mrb[0].mxu0
      %v425 = vadd.f32 %v352, %v424
      %v426 = vpop.f32.mrb[0].mxu0
      %427 = vmatprep.mubr.bf16.mxu0 0
      %428 = vmatmul.mubr.bf16.gmra.mrb[0].mxu0 %v374
      %v429 = vpop.f32.mrb[0].mxu0
      %v430 = vadd.f32 %v352, %v429
      %v431 = vpop.f32.mrb[0].mxu0
      %v432 = vpop.f32.mrb[0].mxu0
      %v433 = vadd.f32 %v352, %v432
      %v434 = vpop.f32.mrb[0].mxu0
      %435 = vmatprep.mubr.bf16.mxu0 0
      %436 = vmatmul.mubr.bf16.gmra.mrb[0].mxu0 %v377
      %v437 = vpop.f32.mrb[0].mxu0
      %v438 = vadd.f32 %v352, %v437
      %v439 = vpop.f32.mrb[0].mxu0
      %v440 = vpop.f32.mrb[0].mxu0
      %v441 = vadd.f32 %v352, %v440
      %v442 = vpop.f32.mrb[0].mxu0
      %443 = vdwg.mxu0
      %v444 = vmul.f32 %v414, %v414
      %v445 = vmul.f32 %v417, %v417
      %v446 = vmul.f32 %v422, %v422
      %v447 = vmul.f32 %v425, %v425
      %v448 = vmul.f32 %v430, %v430
      %v449 = vmul.f32 %v433, %v433
      %v450 = vmul.f32 %v438, %v438
      %v451 = vmul.f32 %v441, %v441
      %v452 = vsel %vm366, %v444, 0.0
      %453 = vadd.xlane.f32.xlu0 %v452
      %v454 = vpop.xlane.xlu0 %453
      %v455 = vsel %vm366, %v445, 0.0
      %456 = vadd.xlane.f32.xlu0 %v455
      %v457 = vpop.xlane.xlu0 %456
      %v458 = vsel %vm366, %v446, 0.0
      %459 = vadd.xlane.f32.xlu0 %v458
      %v460 = vpop.xlane.xlu0 %459
      %v461 = vsel %vm366, %v447, 0.0
      %462 = vadd.xlane.f32.xlu0 %v461
      %v463 = vpop.xlane.xlu0 %462
      %v464 = vsel %vm366, %v448, 0.0
      %465 = vadd.xlane.f32.xlu0 %v464
      %v466 = vpop.xlane.xlu0 %465
      %v467 = vsel %vm366, %v449, 0.0
      %468 = vadd.xlane.f32.xlu0 %v467
      %v469 = vpop.xlane.xlu0 %468
      %v470 = vsel %vm366, %v450, 0.0
      %471 = vadd.xlane.f32.xlu0 %v470
      %v472 = vpop.xlane.xlu0 %471
      %v473 = vsel %vm366, %v451, 0.0
      %474 = vadd.xlane.f32.xlu0 %v473
      %v475 = vpop.xlane.xlu0 %474
      %v476 = vrsqrt.pop %v454
      %v477 = vmul.f32 %v454, %v476
      %vm478 = vcmp.eq.f32.partialorder %v454, inf
      %v479 = vsel %vm478, %v454, %v477
      %vm480 = vcmp.eq.f32.partialorder %v454, 0.0
      %v481 = vand.u32 %v454, 2147483648
      %v482 = vsel %vm480, %v481, %v479
      %v483 = vrsqrt.pop %v457
      %v484 = vmul.f32 %v457, %v483
      %vm485 = vcmp.eq.f32.partialorder %v457, inf
      %v486 = vsel %vm485, %v457, %v484
      %vm487 = vcmp.eq.f32.partialorder %v457, 0.0
      %v488 = vand.u32 %v457, 2147483648
      %v489 = vsel %vm487, %v488, %v486
      %v490 = vrsqrt.pop %v460
      %v491 = vmul.f32 %v460, %v490
      %vm492 = vcmp.eq.f32.partialorder %v460, inf
      %v493 = vsel %vm492, %v460, %v491
      %vm494 = vcmp.eq.f32.partialorder %v460, 0.0
      %v495 = vand.u32 %v460, 2147483648
      %v496 = vsel %vm494, %v495, %v493
      %v497 = vrsqrt.pop %v463
      %v498 = vmul.f32 %v463, %v497
      %vm499 = vcmp.eq.f32.partialorder %v463, inf
      %v500 = vsel %vm499, %v463, %v498
      %vm501 = vcmp.eq.f32.partialorder %v463, 0.0
      %v502 = vand.u32 %v463, 2147483648
      %v503 = vsel %vm501, %v502, %v500
      %v504 = vrsqrt.pop %v466
      %v505 = vmul.f32 %v466, %v504
      %vm506 = vcmp.eq.f32.partialorder %v466, inf
      %v507 = vsel %vm506, %v466, %v505
      %vm508 = vcmp.eq.f32.partialorder %v466, 0.0
      %v509 = vand.u32 %v466, 2147483648
      %v510 = vsel %vm508, %v509, %v507
      %v511 = vrsqrt.pop %v469
      %v512 = vmul.f32 %v469, %v511
      %vm513 = vcmp.eq.f32.partialorder %v469, inf
      %v514 = vsel %vm513, %v469, %v512
      %vm515 = vcmp.eq.f32.partialorder %v469, 0.0
      %v516 = vand.u32 %v469, 2147483648
      %v517 = vsel %vm515, %v516, %v514
      %v518 = vrsqrt.pop %v472
      %v519 = vmul.f32 %v472, %v518
      %vm520 = vcmp.eq.f32.partialorder %v472, inf
      %v521 = vsel %vm520, %v472, %v519
      %vm522 = vcmp.eq.f32.partialorder %v472, 0.0
      %v523 = vand.u32 %v472, 2147483648
      %v524 = vsel %vm522, %v523, %v521
      %v525 = vrsqrt.pop %v475
      %v526 = vmul.f32 %v475, %v525
      %vm527 = vcmp.eq.f32.partialorder %v475, inf
      %v528 = vsel %vm527, %v475, %v526
      %vm529 = vcmp.eq.f32.partialorder %v475, 0.0
      %v530 = vand.u32 %v475, 2147483648
      %v531 = vsel %vm529, %v530, %v528
      %v532 = vadd.f32 %v482, 1e-07
      %v533 = vadd.f32 %v489, 1e-07
      %v534 = vadd.f32 %v496, 1e-07
      %v535 = vadd.f32 %v503, 1e-07
      %v536 = vadd.f32 %v510, 1e-07
      %v537 = vadd.f32 %v517, 1e-07
      %v538 = vadd.f32 %v524, 1e-07
      %v539 = vadd.f32 %v531, 1e-07
      %v540 = vrcp.pop %v532
      %v541 = vrcp.pop %v533
      %v542 = vrcp.pop %v534
      %v543 = vrcp.pop %v535
      %v544 = vrcp.pop %v536
      %v545 = vrcp.pop %v537
      %v546 = vrcp.pop %v538
      %v547 = vrcp.pop %v539
      %v548 = vmul.f32 %v414, %v540
      %v549 = vmul.f32 %v417, %v541
      %v550 = vmul.f32 %v422, %v542
      %v551 = vmul.f32 %v425, %v543
      %v552 = vmul.f32 %v430, %v544
      %v553 = vmul.f32 %v433, %v545
      %v554 = vmul.f32 %v438, %v546
      %v555 = vmul.f32 %v441, %v547
      %556 = vst.msk [vmem:[%s226] sm:$0xff] %vm366, %v548
      %557 = vst.msk [vmem:[%s226 + $0x8] sm:$0xff] %vm366, %v549
      %558 = vst.msk [vmem:[%s226 + $0x10] sm:$0xff] %vm366, %v550
      %559 = vst.msk [vmem:[%s226 + $0x18] sm:$0xff] %vm366, %v551
      %560 = vst.msk [vmem:[%s226 + $0x20] sm:$0xff] %vm366, %v552
      %561 = vst.msk [vmem:[%s226 + $0x28] sm:$0xff] %vm366, %v553
      %562 = vst.msk [vmem:[%s226 + $0x30] sm:$0xff] %vm366, %v554
      %563 = vst.msk [vmem:[%s226 + $0x38] sm:$0xff] %vm366, %v555
      %s564 = smul.u32 8, %s16
      %p565 = scmp.lt.s32.totalorder %s564, 15
      %s566 = scalar_select %p565, %s564, 15
      %s567 = smul.addr %s566, 8
      %s568 = scalar_lea.vmem %s5, %s567
      // Predicated region
      $region41: #{attn_patch_sample_forward_level.2} parent=39 // pred_check
        %p569 = pneg %p144
      $region42: #{attn_patch_sample_forward_level.2} parent=39 // pred_check_branch
        %571 = sbr.rel (%p569) target = $region44
      $region43: #{attn_patch_sample_forward_level.2} parent=39 // pred_region
        %s572 = smul.u32 8, %s16
      $region44: #{attn_patch_sample_forward_level.2} parent=39 // pred_fallthru
        _
    $region40: #{attn_patch_sample_forward_level.2} parent=5 // pred_fallthru
      _
    %p573 = scmp.le.s32.totalorder 2, %s11
    // Predicated region
    $region45: #{attn_patch_sample_forward_level.2} parent=5 // pred_check
      %p574 = pneg %p573
    $region46: #{attn_patch_sample_forward_level.2} parent=5 // pred_check_branch
      %576 = sbr.rel (%p574) target = $region48
    $region47: #{attn_patch_sample_forward_level.2} parent=5 // pred_region
      %s577 = ssub.s32 %s11, 2
      // Predicated region
      $region49: #{attn_patch_sample_forward_level.2} parent=47 // pred_check
        %p578 = pneg %p150
      $region50: #{attn_patch_sample_forward_level.2} parent=47 // pred_check_branch
        %580 = sbr.rel (%p578) target = $region52
      $region51: #{attn_patch_sample_forward_level.2} parent=47 // pred_region
        %s581 = smul.u32 8, %s17
        %p582 = scmp.lt.s32.totalorder %s581, 15
        %s583 = scalar_select %p582, %s581, 15
        %s584 = smul.addr %s583, 8
        %s585 = scalar_lea.vmem %s5, %s584
      $region52: #{attn_patch_sample_forward_level.2} parent=47 // pred_fallthru
        _
    $region48: #{attn_patch_sample_forward_level.2} parent=5 // pred_fallthru
      _
  $region6: #{attn_patch_sample_forward_level.2} parent=0 // loop_footer
    %s15 = sadd.s32 1, %s11
  $region7: #{attn_patch_sample_forward_level.2} parent=0 // loop_footer_branch
    %10 = sbr.rel target = $region3
  $region8: #{attn_patch_sample_forward_level.2} parent=0 // loop_exit
    _

// kernel: attn_patch_sample_forward_level.3
$region0: #{attn_patch_sample_forward_level.3}
  #allocation0 [shape = 'u32[]', space=smem, size = 0x4, offset = 0x4, fixed_abs, tag = 'smem constant byte address 0x4 - core index']
  #allocation1 [shape = 'u32[144,128]{1,0:T(1,128)}', space=vmem, size = 0x12000, scoped, tag = 'internal scratch']
  #allocation2 [shape = 'f32[1,1,1]{2,1,0:T(1,128)S(1)}', space=vmem, size = 0x200, scoped, tag = 'scoped memory for attn_patch_sample_forward_level.3']
  %s0 = inlined_call_operand.vmem [shape: f32[2,8,128], index: 0, kind: input, shape index: {}]
  %s1 = inlined_call_operand.vmem [shape: f32[1,8,1], index: 1, kind: input, shape index: {}]
  %s2 = inlined_call_operand.<no memory space> [shape: f32[1,1,1], index: 2, kind: input, shape index: {}]
  %s3 = inlined_call_operand.vmem [shape: f32[2,1,128], index: 3, kind: output, shape index: {}]
  %s4 = sld [smem:[#allocation0]]
  $region45: #{attn_patch_sample_forward_level.3} parent=0
    _
  %s6 = ssub.s32 1, %s4
  %s7 = scalar_select 0, %s6, %s4
  %v8 = vstv %s2
  %9 = vst [vmem:[#allocation2] sm:$0x1] %v8
  loop: start=0, step=1, limit=4
  $region2: #{attn_patch_sample_forward_level.3} parent=0 // loop_pre_header
    _
  $region3: #{attn_patch_sample_forward_level.3} parent=0 // loop_header
    %s11 = sphi 0, %s15
    %p12 = scmp.ge.s32.totalorder %s11, 4
    %s18 = sphi 0, %s30
    %s19 = sphi 0, %s26
    %s20 = sphi 0, %s18
    %s21 = sphi 0, %s19
    %s22 = sphi 0, %s20
    %s23 = sphi 0, %s21
    %s35 = sphi 0, %s37
    %s38 = sphi 0, %s35
    %s39 = sphi 0, %s38
    %s55 = sphi 0, %s39
    %s59 = sphi 0, %s59
    %s61 = sphi 0, %s59
    %s62 = sphi 0, %s61
    %s76 = sphi 0, %s62
    %s80 = sphi 0, %s80
    %s82 = sphi 0, %s80
    %s83 = sphi 0, %s82
    %s97 = sphi 0, %s83
    %s105 = sphi 0, %s107
    %s108 = sphi 0, %s105
    %s109 = sphi 0, %s108
    %s125 = sphi 0, %s109
  $region4: #{attn_patch_sample_forward_level.3} parent=0 // loop_header_branch
    %14 = sbr.rel (%p12) target = $region8
  $region5: #{attn_patch_sample_forward_level.3} parent=0 // loop_body
    %s16 = ssub.s32 %s11, 1
    %s17 = ssub.s32 %s11, 2
    %s24 = sadd.s32 1, %s19
    %p25 = scmp.ge.s32.totalorder %s24, 1
    %s26 = scalar_select %p25, 0, %s24
    %s27 = sadd.s32 1, %s18
    %s28 = scalar_select %p25, %s27, %s18
    %p29 = scmp.ge.s32.totalorder %s28, 2
    %s30 = scalar_select %p29, 0, %s28
    %s31 = ssub.s32 %s18, %s30
    %s32 = ssub.s32 %s19, %s26
    %s33 = sor.u32 %s31, %s32
    %p34 = scmp.eq.s32.totalorder %s33, 0
    %s36 = sadd.s32 %s35, 1
    %s37 = scalar_select %p34, %s35, %s36
    %p40 = pneg %p34
    %p41 = scmp.eq.s32.totalorder %s11, 1
    %p42 = por %p40, %p41
    %p43 = scmp.ne.s32.totalorder %s35, %s38
    %p44 = scmp.eq.s32.totalorder %s11, 0
    %p45 = por %p43, %p44
    %p46 = scmp.ne.s32.totalorder %s35, %s38
    %p47 = scmp.eq.s32.totalorder %s16, 1
    %p48 = por %p46, %p47
    %p49 = scmp.ne.s32.totalorder %s38, %s39
    %p50 = scmp.eq.s32.totalorder %s16, 0
    %p51 = por %p49, %p50
    %p52 = scmp.ne.s32.totalorder %s38, %s39
    %p53 = scmp.eq.s32.totalorder %s17, 1
    %p54 = por %p52, %p53
    %p56 = scmp.ne.s32.totalorder %s39, %s55
    %p57 = scmp.eq.s32.totalorder %s17, 0
    %p58 = por %p56, %p57
    %s60 = sadd.s32 %s59, 1
    %p63 = scmp.eq.s32.totalorder %s11, 1
    %p64 = scmp.ne.s32.totalorder %s59, %s61
    %p65 = scmp.eq.s32.totalorder %s11, 0
    %p66 = por %p64, %p65
    %p67 = scmp.ne.s32.totalorder %s59, %s61
    %p68 = scmp.eq.s32.totalorder %s16, 1
    %p69 = por %p67, %p68
    %p70 = scmp.ne.s32.totalorder %s61, %s62
    %p71 = scmp.eq.s32.totalorder %s16, 0
    %p72 = por %p70, %p71
    %p73 = scmp.ne.s32.totalorder %s61, %s62
    %p74 = scmp.eq.s32.totalorder %s17, 1
    %p75 = por %p73, %p74
    %p77 = scmp.ne.s32.totalorder %s62, %s76
    %p78 = scmp.eq.s32.totalorder %s17, 0
    %p79 = por %p77, %p78
    %s81 = sadd.s32 %s80, 1
    %p84 = scmp.eq.s32.totalorder %s11, 1
    %p85 = scmp.ne.s32.totalorder %s80, %s82
    %p86 = scmp.eq.s32.totalorder %s11, 0
    %p87 = por %p85, %p86
    %p88 = scmp.ne.s32.totalorder %s80, %s82
    %p89 = scmp.eq.s32.totalorder %s16, 1
    %p90 = por %p88, %p89
    %p91 = scmp.ne.s32.totalorder %s82, %s83
    %p92 = scmp.eq.s32.totalorder %s16, 0
    %p93 = por %p91, %p92
    %p94 = scmp.ne.s32.totalorder %s82, %s83
    %p95 = scmp.eq.s32.totalorder %s17, 1
    %p96 = por %p94, %p95
    %p98 = scmp.ne.s32.totalorder %s83, %s97
    %p99 = scmp.eq.s32.totalorder %s17, 0
    %p100 = por %p98, %p99
    %s101 = ssub.s32 %s18, %s30
    %s102 = ssub.s32 %s19, %s26
    %s103 = sor.u32 %s101, %s102
    %p104 = scmp.eq.s32.totalorder %s103, 0
    %s106 = sadd.s32 %s105, 1
    %s107 = scalar_select %p104, %s105, %s106
    %p110 = pneg %p104
    %p111 = scmp.eq.s32.totalorder %s11, 1
    %p112 = por %p110, %p111
    %p113 = scmp.ne.s32.totalorder %s105, %s108
    %p114 = scmp.eq.s32.totalorder %s11, 0
    %p115 = por %p113, %p114
    %p116 = scmp.ne.s32.totalorder %s105, %s108
    %p117 = scmp.eq.s32.totalorder %s16, 1
    %p118 = por %p116, %p117
    %p119 = scmp.ne.s32.totalorder %s108, %s109
    %p120 = scmp.eq.s32.totalorder %s16, 0
    %p121 = por %p119, %p120
    %p122 = scmp.ne.s32.totalorder %s108, %s109
    %p123 = scmp.eq.s32.totalorder %s17, 1
    %p124 = por %p122, %p123
    %p126 = scmp.ne.s32.totalorder %s109, %s125
    %p127 = scmp.eq.s32.totalorder %s17, 0
    %p128 = por %p126, %p127
    %p129 = scmp.le.s32.totalorder 1, %s11
    %p130 = scmp.lt.s32.totalorder %s11, 3
    %p131 = pnand %p129, %p130
    %p132 = pneg %p131
    // Predicated region
    $region9: #{attn_patch_sample_forward_level.3} parent=5 // pred_check
      _
    $region10: #{attn_patch_sample_forward_level.3} parent=5 // pred_check_branch
      %134 = sbr.rel (%p131) target = $region12
    $region11: #{attn_patch_sample_forward_level.3} parent=5 // pred_region
      %s135 = ssub.s32 %s11, 1
      // Predicated region
      $region13: #{attn_patch_sample_forward_level.3} parent=11 // pred_check
        %p136 = pneg %p72
      $region14: #{attn_patch_sample_forward_level.3} parent=11 // pred_check_branch
        %138 = sbr.rel (%p136) target = $region16
      $region15: #{attn_patch_sample_forward_level.3} parent=11 // pred_region
        _
      $region16: #{attn_patch_sample_forward_level.3} parent=11 // pred_fallthru
        _
      // Predicated region
      $region17: #{attn_patch_sample_forward_level.3} parent=11 // pred_check
        %p139 = pneg %p93
      $region18: #{attn_patch_sample_forward_level.3} parent=11 // pred_check_branch
        %141 = sbr.rel (%p139) target = $region20
      $region19: #{attn_patch_sample_forward_level.3} parent=11 // pred_region
        _
      $region20: #{attn_patch_sample_forward_level.3} parent=11 // pred_fallthru
        _
    $region12: #{attn_patch_sample_forward_level.3} parent=5 // pred_fallthru
      _
    %p142 = scmp.lt.s32.totalorder %s11, 2
    // Predicated region
    $region21: #{attn_patch_sample_forward_level.3} parent=5 // pred_check
      %p143 = pneg %p142
    $region22: #{attn_patch_sample_forward_level.3} parent=5 // pred_check_branch
      %145 = sbr.rel (%p143) target = $region24
    $region23: #{attn_patch_sample_forward_level.3} parent=5 // pred_region
      // Predicated region
      $region25: #{attn_patch_sample_forward_level.3} parent=23 // pred_check
        %p146 = pneg %p45
      $region26: #{attn_patch_sample_forward_level.3} parent=23 // pred_check_branch
        %148 = sbr.rel (%p146) target = $region28
      $region27: #{attn_patch_sample_forward_level.3} parent=23 // pred_region
        %p149 = scmp.lt.s32.totalorder %s18, 1
        %s150 = scalar_select %p149, %s18, 1
        %p151 = scmp.lt.s32.totalorder %s19, 0
        %s152 = scalar_select %p151, %s19, 0
        %s153 = sadd.s32 %s152, %s150
        %s154 = smul.addr %s153, 8
        %s155 = scalar_lea.vmem %s0, %s154
      $region28: #{attn_patch_sample_forward_level.3} parent=23 // pred_fallthru
        _
    $region24: #{attn_patch_sample_forward_level.3} parent=5 // pred_fallthru
      _
    %p156 = scmp.le.s32.totalorder 1, %s11
    %p157 = scmp.lt.s32.totalorder %s11, 3
    %p158 = pnand %p156, %p157
    %p159 = pneg %p158
    // Predicated region
    $region29: #{attn_patch_sample_forward_level.3} parent=5 // pred_check
      _
    $region30: #{attn_patch_sample_forward_level.3} parent=5 // pred_check_branch
      %161 = sbr.rel (%p158) target = $region32
    $region31: #{attn_patch_sample_forward_level.3} parent=5 // pred_region
      %s162 = ssub.s32 %s11, 1
      %p163 = scmp.lt.s32.totalorder %s20, 1
      %s164 = scalar_select %p163, %s20, 1
      %p165 = scmp.lt.s32.totalorder %s21, 0
      %s166 = scalar_select %p165, %s21, 0
      %s167 = sadd.s32 %s166, %s164
      %s168 = smul.addr %s167, 8
      %s169 = scalar_lea.vmem %s0, %s168
      %p170 = pneg %p51
      %p171 = pneg %p48
      %p172 = pneg %p72
      %p173 = pneg %p69
      %p174 = pneg %p93
      %p175 = pneg %p90
      %p176 = pneg %p121
      %p177 = pneg %p118
      %p178 = scmp.lt.s32.totalorder %s20, 1
      %s179 = scalar_select %p178, %s20, 1
      %p180 = scmp.lt.s32.totalorder %s21, 0
      %s181 = scalar_select %p180, %s21, 0
      %s182 = sadd.s32 %s181, %s179
      %s183 = scalar_lea.vmem %s3, %s182
      %p184 = scmp.lt.s32.totalorder %s20, 1
      %s185 = scalar_select %p184, %s20, 1
      %p186 = scmp.lt.s32.totalorder %s21, 0
      %s187 = scalar_select %p186, %s21, 0
      %s188 = sadd.s32 %s187, %s185
      %s189 = smul.addr %s188, 8
      %s190 = scalar_lea.vmem %s0, %s189
      %p191 = scmp.lt.s32.totalorder %s20, 1
      %s192 = scalar_select %p191, %s20, 1
      %p193 = scmp.lt.s32.totalorder %s21, 0
      %s194 = scalar_select %p193, %s21, 0
      %s195 = sadd.s32 %s194, %s192
      %s196 = scalar_lea.vmem %s3, %s195
      %v197 = vld [vmem:[%s190] sm:$0xff]
      %v198 = vld [vmem:[%s1] sm:$0xff]
      %200 = vset.pattern.permute.xlu0 0
      %201 = vperm.xlu0 %200, %v198
      %v202 = vpop.permute.xlu0 %201
      %v204 = vmul.f32 %v197, %v202
      %v205 = vrot.slane %v204, 4
      %v206 = vadd.f32 %v204, %v205
      %v207 = vrot.slane %v206, 2
      %v208 = vadd.f32 %v206, %v207
      %v209 = vrot.slane %v208, 1
      %v210 = vadd.f32 %v208, %v209
      %v211 = vld [vmem:[#allocation2] sm:$0x1]
      %213 = vset.pattern.permute.xlu0 0
      %214 = vperm.xlu0 %213, %v211
      %v215 = vpop.permute.xlu0 %214
      %v217 = vlaneseq
      %v218 = vshrl.u32 %v217, 7
      %v219 = vsub.s32 0, %v218
      %v220 = vrot.slane %v215, %v219
      %v221 = vadd.f32 %v210, %v220
      %v222 = vxor.u32 %v221, 2147483648
      %v223 = vmul.f32 %v222, 1.442695
      %v224 = vpow.pop %v223
      %v225 = vadd.f32 %v224, 1.0
      %v226 = vrcp.pop %v225
      %v227 = vmul.f32 1.0, %v226
      %228 = vst [vmem:[%s196] sm:$0x1] %v227
      %p229 = scmp.lt.s32.totalorder %s20, 1
      %s230 = scalar_select %p229, %s20, 1
      %p231 = scmp.lt.s32.totalorder %s21, 0
      %s232 = scalar_select %p231, %s21, 0
      %s233 = sadd.s32 %s232, %s230
      %s234 = scalar_lea.vmem %s3, %s233
      // Predicated region
      $region33: #{attn_patch_sample_forward_level.3} parent=31 // pred_check
        %p235 = pneg %p118
      $region34: #{attn_patch_sample_forward_level.3} parent=31 // pred_check_branch
        %237 = sbr.rel (%p235) target = $region36
      $region35: #{attn_patch_sample_forward_level.3} parent=31 // pred_region
        _
      $region36: #{attn_patch_sample_forward_level.3} parent=31 // pred_fallthru
        _
    $region32: #{attn_patch_sample_forward_level.3} parent=5 // pred_fallthru
      _
    %p238 = scmp.le.s32.totalorder 2, %s11
    // Predicated region
    $region37: #{attn_patch_sample_forward_level.3} parent=5 // pred_check
      %p239 = pneg %p238
    $region38: #{attn_patch_sample_forward_level.3} parent=5 // pred_check_branch
      %241 = sbr.rel (%p239) target = $region40
    $region39: #{attn_patch_sample_forward_level.3} parent=5 // pred_region
      %s242 = ssub.s32 %s11, 2
      // Predicated region
      $region41: #{attn_patch_sample_forward_level.3} parent=39 // pred_check
        %p243 = pneg %p124
      $region42: #{attn_patch_sample_forward_level.3} parent=39 // pred_check_branch
        %245 = sbr.rel (%p243) target = $region44
      $region43: #{attn_patch_sample_forward_level.3} parent=39 // pred_region
        %p246 = scmp.lt.s32.totalorder %s22, 1
        %s247 = scalar_select %p246, %s22, 1
        %p248 = scmp.lt.s32.totalorder %s23, 0
        %s249 = scalar_select %p248, %s23, 0
        %s250 = sadd.s32 %s249, %s247
        %s251 = scalar_lea.vmem %s3, %s250
      $region44: #{attn_patch_sample_forward_level.3} parent=39 // pred_fallthru
        _
    $region40: #{attn_patch_sample_forward_level.3} parent=5 // pred_fallthru
      _
  $region6: #{attn_patch_sample_forward_level.3} parent=0 // loop_footer
    %s15 = sadd.s32 1, %s11
  $region7: #{attn_patch_sample_forward_level.3} parent=0 // loop_footer_branch
    %10 = sbr.rel target = $region3
  $region8: #{attn_patch_sample_forward_level.3} parent=0 // loop_exit
    _

</llo_original>
